<compile_context>
chip_gen: v5e
topology: v5e:2x2
jax: 0.10.0
libtpu: 0.0.40
codegen_flags: <defaults>
</compile_context>

<pallas_src>
import math

import jax
import jax.numpy as jnp
from jax.experimental import pallas as pl
from jax.experimental.pallas import tpu as pltpu

INPUT_FEATURES = 20       # F1 + F2 (concatenated channel features)
HIDDEN_DIM = 64
MIN_VARIANCE = 1e-6
MAX_VARIANCE = 1.0
LOG_MIN = math.log(MIN_VARIANCE)
LOG_MAX = math.log(MAX_VARIANCE)

# Per-row VMEM of the pipelined blocks (ch1 + ch2 + out, each lane-padded to
# 128 lanes of f32, double-buffered): 3 blocks * 128 * 4 B * 2 = 3072 B/row.
_PIPELINED_BYTES_PER_ROW = 3 * 128 * 4 * 2
_VMEM_BLOCK_BUDGET = 12 << 20            # ~12 MiB of pipelined blocks
_MAX_TILE_ROWS = (_VMEM_BLOCK_BUDGET // _PIPELINED_BYTES_PER_ROW) // 8 * 8  # 4096
_MIN_USEFUL_TILE = 512                   # amortize ~0.35 us per grid step
_MIN_GRID_STEPS = 4                      # 2 TCs (v7x) x >= 2 steps each


def _round_up8(n):
    return ((int(n) + 7) // 8) * 8


def _auto_tile_b(batch):
    rows = _round_up8(batch)
    tb = _round_up8(pl.cdiv(rows, _MIN_GRID_STEPS))
    tb = max(_MIN_USEFUL_TILE, tb)
    tb = min(tb, _MAX_TILE_ROWS, rows)
    return max(8, tb)


def _ratio_net_kernel(ch1_ref, ch2_ref,
                      w1a_ref, w1b_ref, b1_ref,
                      w2_ref, b2_ref,
                      wh1_ref, bh1_ref,
                      wh2_ref, bh2_ref,
                      out_ref):
    # shared_layers: Linear -> ReLU -> (Dropout: identity in eval) -> Linear -> ReLU
    # Concat is folded into the first matmul: x@W1 == ch1@W1a + ch2@W1b.
    h1 = (jnp.dot(ch1_ref[...], w1a_ref[...], preferred_element_type=jnp.float32)
          + jnp.dot(ch2_ref[...], w1b_ref[...], preferred_element_type=jnp.float32)
          + b1_ref[...])
    h1 = jnp.maximum(h1, 0.0)
    h2 = jnp.dot(h1, w2_ref[...], preferred_element_type=jnp.float32) + b2_ref[...]
    h2 = jnp.maximum(h2, 0.0)

    # Fused heads: lanes 0:16 = mean-head hidden, lanes 16:32 = log-var-head hidden.
    g = jnp.dot(h2, wh1_ref[...], preferred_element_type=jnp.float32) + bh1_ref[...]
    g = jnp.maximum(g, 0.0)
    # Block-diagonal second-layer weights -> column 0 = mean logit, column 1 = log-var.
    y = jnp.dot(g, wh2_ref[...], preferred_element_type=jnp.float32) + bh2_ref[...]

    # Column 0 -> sigmoid (ratio mean); column 1 -> clamp (ratio log-variance).
    # Numerically stable sigmoid: exp of a non-positive argument only, so padded
    # garbage rows in the final partial tile can never produce inf/NaN.
    z = jnp.exp(-jnp.abs(y))                                  # EUP
    inv = pl.reciprocal(1.0 + z, approx=False)                # EUP (exact; 1e-5 budget)
    sig = jnp.where(y >= 0.0, inv, z * inv)
    clp = jnp.clip(y, LOG_MIN, LOG_MAX)
    col0 = jax.lax.broadcasted_iota(jnp.int32, y.shape, 1) == 0
    out_ref[...] = jnp.where(col0, sig, clp).astype(out_ref.dtype)


def _xavier_uniform(key, fan_in, fan_out, dtype=jnp.float32):
    # matches nn.init.xavier_uniform_ (gain=1); stored as (in, out) so kernel does x @ W
    limit = math.sqrt(6.0 / (fan_in + fan_out))
    return jax.random.uniform(key, (fan_in, fan_out), dtype=dtype,
                              minval=-limit, maxval=limit)


def init_ratio_net_params(key, input_features=INPUT_FEATURES, hidden_dim=HIDDEN_DIM):
    """PyTorch-equivalent parameters (weights transposed to (in, out))."""
    h2 = hidden_dim // 2
    h4 = hidden_dim // 4
    keys = jax.random.split(key, 6)
    return {
        "w1": _xavier_uniform(keys[0], input_features, hidden_dim),
        "b1": jnp.zeros((1, hidden_dim), jnp.float32),
        "w2": _xavier_uniform(keys[1], hidden_dim, h2),
        "b2": jnp.zeros((1, h2), jnp.float32),
        "wm1": _xavier_uniform(keys[2], h2, h4),
        "bm1": jnp.zeros((1, h4), jnp.float32),
        "wm2": _xavier_uniform(keys[3], h4, 1),
        "bm2": jnp.zeros((1, 1), jnp.float32),
        "wv1": _xavier_uniform(keys[4], h2, h4),
        "bv1": jnp.zeros((1, h4), jnp.float32),
        "wv2": _xavier_uniform(keys[5], h4, 1),
        "bv2": jnp.zeros((1, 1), jnp.float32),
    }


def pack_ratio_net_params(params, input_features=INPUT_FEATURES):
    """One-time repacking into the kernel layout (split w1, fuse the two heads)."""
    f1 = input_features // 2
    h4 = params["wm1"].shape[1]
    w1a = params["w1"][:f1, :]
    w1b = params["w1"][f1:, :]
    wh1 = jnp.concatenate([params["wm1"], params["wv1"]], axis=1)   # (32, 32)
    bh1 = jnp.concatenate([params["bm1"], params["bv1"]], axis=1)   # (1, 32)
    wh2 = jnp.zeros((2 * h4, 2), jnp.float32)                       # block-diagonal (32, 2)
    wh2 = wh2.at[:h4, 0:1].set(params["wm2"]).at[h4:, 1:2].set(params["wv2"])
    bh2 = jnp.concatenate([params["bm2"], params["bv2"]], axis=1)   # (1, 2)
    return {
        "w1a": w1a, "w1b": w1b, "b1": params["b1"],
        "w2": params["w2"], "b2": params["b2"],
        "wh1": wh1, "bh1": bh1, "wh2": wh2, "bh2": bh2,
    }


def ratio_net_forward(ch1_features, ch2_features, packed, *, tile_b=None):
    """Equivalent to RatioNet.forward (eval mode; Dropout is identity).

    Returns a fused (B, 2) array: column 0 = ratio_mean (post-sigmoid),
    column 1 = ratio_log_var (clamped).  Use split_ratio_outputs() if the
    PyTorch two-tensor signature is needed (avoids paying two extra strided
    slice launches when the consumer can read columns directly).
    """
    ch1 = ch1_features.astype(jnp.float32)
    ch2 = ch2_features.astype(jnp.float32)
    B, f1 = ch1.shape
    f2 = ch2.shape[1]

    if tile_b is None:
        tb = _auto_tile_b(B)
    else:
        tb = max(8, min(_round_up8(tile_b), _round_up8(B), 8192))
    grid = (pl.cdiv(B, tb),)

    param_order = ("w1a", "w1b", "b1", "w2", "b2", "wh1", "bh1", "wh2", "bh2")
    ordered_params = [packed[k] for k in param_order]

    def batch_spec(ncols):
        return pl.BlockSpec((tb, ncols), lambda i: (i, 0))

    def resident_spec(arr):
        # Constant index_map -> fetched once, stays VMEM-resident across grid steps.
        return pl.BlockSpec(arr.shape, lambda i: (0, 0))

    in_specs = ([batch_spec(f1), batch_spec(f2)]
                + [resident_spec(p) for p in ordered_params])
    out_specs = pl.BlockSpec((tb, 2), lambda i: (i, 0))

    h_dim = packed["w1a"].shape[1]     # 64
    h2_dim = packed["w2"].shape[1]     # 32
    gh_dim = packed["wh1"].shape[1]    # 32
    flops = 2 * B * ((f1 + f2) * h_dim + h_dim * h2_dim + h2_dim * gh_dim + gh_dim * 2)
    param_bytes = sum(int(p.size) * 4 for p in ordered_params)
    cost = pl.CostEstimate(
        flops=flops,
        transcendentals=4 * B,                      # exp + reciprocal on 2 lanes/row
        bytes_accessed=B * (f1 + f2 + 2) * 4 + param_bytes,
    )

    out = pl.pallas_call(
        _ratio_net_kernel,
        out_shape=jax.ShapeDtypeStruct((B, 2), jnp.float32),
        grid=grid,
        in_specs=in_specs,
        out_specs=out_specs,
        compiler_params=pltpu.CompilerParams(
            dimension_semantics=("parallel",),
            # Explicit limit: covers the 16 MiB scoped default on v5e while
            # staying well under v7x's 64 MiB physical VMEM.
            vmem_limit_bytes=32 << 20,
        ),
        cost_estimate=cost,
    )(ch1, ch2, *ordered_params)

    return out


def split_ratio_outputs(out):
    """Convenience split into the PyTorch-style (mean (B,1), log_var (B,1))."""
    return out[:, 0:1], out[:, 1:2]


def _reference_forward(ch1, ch2, params):
    """Pure-JAX reference for correctness checking (unfused, PyTorch layout)."""
    x = jnp.concatenate([ch1, ch2], axis=1).astype(jnp.float32)
    h = jnp.maximum(x @ params["w1"] + params["b1"], 0.0)
    h = jnp.maximum(h @ params["w2"] + params["b2"], 0.0)
    m = jnp.maximum(h @ params["wm1"] + params["bm1"], 0.0)
    m = jax.nn.sigmoid(m @ params["wm2"] + params["bm2"])
    v = jnp.maximum(h @ params["wv1"] + params["bv1"], 0.0)
    v = jnp.clip(v @ params["wv2"] + params["bv2"], LOG_MIN, LOG_MAX)
    return m, v


if __name__ == "__main__":
    key = jax.random.PRNGKey(0)
    k_params, k_ch1, k_ch2 = jax.random.split(key, 3)

    params = init_ratio_net_params(k_params)
    packed = pack_ratio_net_params(params)

    F1 = INPUT_FEATURES // 2  # 10
    F2 = INPUT_FEATURES - F1  # 10

    # Case 1: tiny batch, single grid step (auto tile).
    B = 8
    ch1 = jax.random.normal(k_ch1, (B, F1), dtype=jnp.float32)
    ch2 = jax.random.normal(k_ch2, (B, F2), dtype=jnp.float32)
    out = jax.block_until_ready(ratio_net_forward(ch1, ch2, packed))
    mean, log_var = split_ratio_outputs(out)
    ref_mean, ref_log_var = _reference_forward(ch1, ch2, params)
    assert out.shape == (B, 2)
    assert mean.shape == (B, 1) and log_var.shape == (B, 1)
    assert jnp.allclose(mean, ref_mean, atol=1e-5, rtol=1e-5)
    assert jnp.allclose(log_var, ref_log_var, atol=1e-5, rtol=1e-5)

    # Case 2: multi-step grid with a partial final batch tile (exercises pipeline + masking).
    B2 = 40
    ch1b = jax.random.normal(jax.random.PRNGKey(1), (B2, F1), dtype=jnp.float32)
    ch2b = 4.0 * jax.random.normal(jax.random.PRNGKey(2), (B2, F2), dtype=jnp.float32)
    out2 = jax.block_until_ready(ratio_net_forward(ch1b, ch2b, packed, tile_b=16))
    mean2, log_var2 = split_ratio_outputs(out2)
    ref_mean2, ref_log_var2 = _reference_forward(ch1b, ch2b, params)
    assert mean2.shape == (B2, 1) and log_var2.shape == (B2, 1)
    assert jnp.all(jnp.isfinite(out2))
    assert jnp.allclose(mean2, ref_mean2, atol=1e-5, rtol=1e-5)
    assert jnp.allclose(log_var2, ref_log_var2, atol=1e-5, rtol=1e-5)

    print("KERNEL_OK")
</pallas_src>

<mosaic_0001>
module attributes {stable_mosaic.version = 11 : i64} {
  func.func @_ratio_net_kernel(%arg0: i32, %arg1: memref<8x10xf32, #tpu.memory_space<vmem>>, %arg2: memref<8x10xf32, #tpu.memory_space<vmem>>, %arg3: memref<10x64xf32, #tpu.memory_space<vmem>>, %arg4: memref<10x64xf32, #tpu.memory_space<vmem>>, %arg5: memref<1x64xf32, #tpu.memory_space<vmem>>, %arg6: memref<64x32xf32, #tpu.memory_space<vmem>>, %arg7: memref<1x32xf32, #tpu.memory_space<vmem>>, %arg8: memref<32x32xf32, #tpu.memory_space<vmem>>, %arg9: memref<1x32xf32, #tpu.memory_space<vmem>>, %arg10: memref<32x2xf32, #tpu.memory_space<vmem>>, %arg11: memref<1x2xf32, #tpu.memory_space<vmem>>, %arg12: memref<8x2xf32, #tpu.memory_space<vmem>>) attributes {dimension_semantics = [#tpu.dimension_semantics<parallel>], iteration_bounds = array<i64: 1>, scalar_prefetch = 0 : i64, scratch_operands = 0 : i64, tpu.core_type = #tpu.core_type<tc>, window_params = [{transform_indices = @transform_0, window_bounds = array<i64: 8, 10>}, {transform_indices = @transform_1, window_bounds = array<i64: 8, 10>}, {pipeline_mode = #tpu.pipeline_mode<synchronous>, transform_indices = @transform_2, window_bounds = array<i64: 10, 64>}, {pipeline_mode = #tpu.pipeline_mode<synchronous>, transform_indices = @transform_3, window_bounds = array<i64: 10, 64>}, {pipeline_mode = #tpu.pipeline_mode<synchronous>, transform_indices = @transform_4, window_bounds = array<i64: 1, 64>}, {pipeline_mode = #tpu.pipeline_mode<synchronous>, transform_indices = @transform_5, window_bounds = array<i64: 64, 32>}, {pipeline_mode = #tpu.pipeline_mode<synchronous>, transform_indices = @transform_6, window_bounds = array<i64: 1, 32>}, {pipeline_mode = #tpu.pipeline_mode<synchronous>, transform_indices = @transform_7, window_bounds = array<i64: 32, 32>}, {pipeline_mode = #tpu.pipeline_mode<synchronous>, transform_indices = @transform_8, window_bounds = array<i64: 1, 32>}, {pipeline_mode = #tpu.pipeline_mode<synchronous>, transform_indices = @transform_9, window_bounds = array<i64: 32, 2>}, {pipeline_mode = #tpu.pipeline_mode<synchronous>, transform_indices = @transform_10, window_bounds = array<i64: 1, 2>}, {transform_indices = @transform_11, window_bounds = array<i64: 8, 2>}]} {
    %c0 = arith.constant 0 : index
    %c0_0 = arith.constant 0 : index
    %0 = vector.load %arg1[%c0, %c0_0] : memref<8x10xf32, #tpu.memory_space<vmem>>, vector<8x10xf32>
    %c0_1 = arith.constant 0 : index
    %c0_2 = arith.constant 0 : index
    %1 = vector.load %arg3[%c0_1, %c0_2] : memref<10x64xf32, #tpu.memory_space<vmem>>, vector<10x64xf32>
    %cst = arith.constant dense<0.000000e+00> : vector<8x64xf32>
    %2 = tpu.matmul %0, %1, %cst {dimension_numbers = #tpu.dot_dimension_numbers<[1], [0], [0], [1], [0, 0, 1, 1], [], []>} : vector<8x10xf32>, vector<10x64xf32>, vector<8x64xf32> -> vector<8x64xf32>
    %c0_3 = arith.constant 0 : index
    %c0_4 = arith.constant 0 : index
    %3 = vector.load %arg2[%c0_3, %c0_4] : memref<8x10xf32, #tpu.memory_space<vmem>>, vector<8x10xf32>
    %c0_5 = arith.constant 0 : index
    %c0_6 = arith.constant 0 : index
    %4 = vector.load %arg4[%c0_5, %c0_6] : memref<10x64xf32, #tpu.memory_space<vmem>>, vector<10x64xf32>
    %cst_7 = arith.constant dense<0.000000e+00> : vector<8x64xf32>
    %5 = tpu.matmul %3, %4, %cst_7 {dimension_numbers = #tpu.dot_dimension_numbers<[1], [0], [0], [1], [0, 0, 1, 1], [], []>} : vector<8x10xf32>, vector<10x64xf32>, vector<8x64xf32> -> vector<8x64xf32>
    %6 = arith.addf %2, %5 : vector<8x64xf32>
    %c0_8 = arith.constant 0 : index
    %c0_9 = arith.constant 0 : index
    %7 = vector.load %arg5[%c0_8, %c0_9] : memref<1x64xf32, #tpu.memory_space<vmem>>, vector<1x64xf32>
    %8 = vector.broadcast %7 : vector<1x64xf32> to vector<8x64xf32>
    %9 = arith.addf %6, %8 : vector<8x64xf32>
    %cst_10 = arith.constant 0.000000e+00 : f32
    %10 = vector.broadcast %cst_10 : f32 to vector<8x64xf32>
    %11 = arith.maximumf %9, %10 : vector<8x64xf32>
    %c0_11 = arith.constant 0 : index
    %c0_12 = arith.constant 0 : index
    %12 = vector.load %arg6[%c0_11, %c0_12] : memref<64x32xf32, #tpu.memory_space<vmem>>, vector<64x32xf32>
    %cst_13 = arith.constant dense<0.000000e+00> : vector<8x32xf32>
    %13 = tpu.matmul %11, %12, %cst_13 {dimension_numbers = #tpu.dot_dimension_numbers<[1], [0], [0], [1], [0, 0, 1, 1], [], []>} : vector<8x64xf32>, vector<64x32xf32>, vector<8x32xf32> -> vector<8x32xf32>
    %c0_14 = arith.constant 0 : index
    %c0_15 = arith.constant 0 : index
    %14 = vector.load %arg7[%c0_14, %c0_15] : memref<1x32xf32, #tpu.memory_space<vmem>>, vector<1x32xf32>
    %15 = vector.broadcast %14 : vector<1x32xf32> to vector<8x32xf32>
    %16 = arith.addf %13, %15 : vector<8x32xf32>
    %cst_16 = arith.constant 0.000000e+00 : f32
    %17 = vector.broadcast %cst_16 : f32 to vector<8x32xf32>
    %18 = arith.maximumf %16, %17 : vector<8x32xf32>
    %c0_17 = arith.constant 0 : index
    %c0_18 = arith.constant 0 : index
    %19 = vector.load %arg8[%c0_17, %c0_18] : memref<32x32xf32, #tpu.memory_space<vmem>>, vector<32x32xf32>
    %cst_19 = arith.constant dense<0.000000e+00> : vector<8x32xf32>
    %20 = tpu.matmul %18, %19, %cst_19 {dimension_numbers = #tpu.dot_dimension_numbers<[1], [0], [0], [1], [0, 0, 1, 1], [], []>} : vector<8x32xf32>, vector<32x32xf32>, vector<8x32xf32> -> vector<8x32xf32>
    %c0_20 = arith.constant 0 : index
    %c0_21 = arith.constant 0 : index
    %21 = vector.load %arg9[%c0_20, %c0_21] : memref<1x32xf32, #tpu.memory_space<vmem>>, vector<1x32xf32>
    %22 = vector.broadcast %21 : vector<1x32xf32> to vector<8x32xf32>
    %23 = arith.addf %20, %22 : vector<8x32xf32>
    %cst_22 = arith.constant 0.000000e+00 : f32
    %24 = vector.broadcast %cst_22 : f32 to vector<8x32xf32>
    %25 = arith.maximumf %23, %24 : vector<8x32xf32>
    %c0_23 = arith.constant 0 : index
    %c0_24 = arith.constant 0 : index
    %26 = vector.load %arg10[%c0_23, %c0_24] : memref<32x2xf32, #tpu.memory_space<vmem>>, vector<32x2xf32>
    %cst_25 = arith.constant dense<0.000000e+00> : vector<8x2xf32>
    %27 = tpu.matmul %25, %26, %cst_25 {dimension_numbers = #tpu.dot_dimension_numbers<[1], [0], [0], [1], [0, 0, 1, 1], [], []>} : vector<8x32xf32>, vector<32x2xf32>, vector<8x2xf32> -> vector<8x2xf32>
    %c0_26 = arith.constant 0 : index
    %c0_27 = arith.constant 0 : index
    %28 = vector.load %arg11[%c0_26, %c0_27] : memref<1x2xf32, #tpu.memory_space<vmem>>, vector<1x2xf32>
    %29 = vector.broadcast %28 : vector<1x2xf32> to vector<8x2xf32>
    %30 = arith.addf %27, %29 : vector<8x2xf32>
    %31 = math.absf %30 : vector<8x2xf32>
    %cst_28 = arith.constant 0.000000e+00 : f32
    %32 = vector.broadcast %cst_28 : f32 to vector<8x2xf32>
    %33 = arith.subf %32, %31 : vector<8x2xf32>
    %34 = math.exp %33 : vector<8x2xf32>
    %cst_29 = arith.constant 1.000000e+00 : f32
    %35 = vector.broadcast %cst_29 : f32 to vector<8x2xf32>
    %36 = arith.addf %35, %34 : vector<8x2xf32>
    %37 = tpu.reciprocal %36 : vector<8x2xf32> -> vector<8x2xf32>
    %cst_30 = arith.constant 0.000000e+00 : f32
    %38 = vector.broadcast %cst_30 : f32 to vector<8x2xf32>
    %39 = arith.cmpf oge, %30, %38 : vector<8x2xf32>
    %40 = arith.mulf %34, %37 : vector<8x2xf32>
    %41 = arith.select %39, %37, %40 : vector<8x2xi1>, vector<8x2xf32>
    %cst_31 = arith.constant -13.8155107 : f32
    %cst_32 = arith.constant 0.000000e+00 : f32
    %42 = vector.broadcast %cst_31 : f32 to vector<8x2xf32>
    %43 = arith.maximumf %42, %30 : vector<8x2xf32>
    %44 = vector.broadcast %cst_32 : f32 to vector<8x2xf32>
    %45 = arith.minimumf %44, %43 : vector<8x2xf32>
    %46 = tpu.iota {dimensions = array<i32: 1>} : vector<8x2xi32>
    %c0_i32 = arith.constant 0 : i32
    %47 = vector.broadcast %c0_i32 : i32 to vector<8x2xi32>
    %48 = arith.cmpi eq, %46, %47 : vector<8x2xi32>
    %49 = arith.select %48, %41, %45 : vector<8x2xi1>, vector<8x2xf32>
    %c0_33 = arith.constant 0 : index
    %c0_34 = arith.constant 0 : index
    %50 = vector.load %arg12[%c0_33, %c0_34] : memref<8x2xf32, #tpu.memory_space<vmem>>, vector<8x2xf32>
    tpu.vector_store %arg12[%c0_33, %c0_34], %49 {strides = array<i32>} : memref<8x2xf32, #tpu.memory_space<vmem>>, vector<8x2xf32>,
    return
  }
  func.func @transform_0(%arg0: i32) -> (i32, i32) {
    %c0_i32 = arith.constant 0 : i32
    %c0_i32_0 = arith.constant 0 : i32
    return %arg0, %c0_i32 : i32, i32
  }
  func.func @transform_1(%arg0: i32) -> (i32, i32) {
    %c0_i32 = arith.constant 0 : i32
    %c0_i32_0 = arith.constant 0 : i32
    return %arg0, %c0_i32 : i32, i32
  }
  func.func @transform_2(%arg0: i32) -> (i32, i32) {
    %c0_i32 = arith.constant 0 : i32
    %c0_i32_0 = arith.constant 0 : i32
    %c0_i32_1 = arith.constant 0 : i32
    return %c0_i32, %c0_i32_0 : i32, i32
  }
  func.func @transform_3(%arg0: i32) -> (i32, i32) {
    %c0_i32 = arith.constant 0 : i32
    %c0_i32_0 = arith.constant 0 : i32
    %c0_i32_1 = arith.constant 0 : i32
    return %c0_i32, %c0_i32_0 : i32, i32
  }
  func.func @transform_4(%arg0: i32) -> (i32, i32) {
    %c0_i32 = arith.constant 0 : i32
    %c0_i32_0 = arith.constant 0 : i32
    %c0_i32_1 = arith.constant 0 : i32
    return %c0_i32, %c0_i32_0 : i32, i32
  }
  func.func @transform_5(%arg0: i32) -> (i32, i32) {
    %c0_i32 = arith.constant 0 : i32
    %c0_i32_0 = arith.constant 0 : i32
    %c0_i32_1 = arith.constant 0 : i32
    return %c0_i32, %c0_i32_0 : i32, i32
  }
  func.func @transform_6(%arg0: i32) -> (i32, i32) {
    %c0_i32 = arith.constant 0 : i32
    %c0_i32_0 = arith.constant 0 : i32
    %c0_i32_1 = arith.constant 0 : i32
    return %c0_i32, %c0_i32_0 : i32, i32
  }
  func.func @transform_7(%arg0: i32) -> (i32, i32) {
    %c0_i32 = arith.constant 0 : i32
    %c0_i32_0 = arith.constant 0 : i32
    %c0_i32_1 = arith.constant 0 : i32
    return %c0_i32, %c0_i32_0 : i32, i32
  }
  func.func @transform_8(%arg0: i32) -> (i32, i32) {
    %c0_i32 = arith.constant 0 : i32
    %c0_i32_0 = arith.constant 0 : i32
    %c0_i32_1 = arith.constant 0 : i32
    return %c0_i32, %c0_i32_0 : i32, i32
  }
  func.func @transform_9(%arg0: i32) -> (i32, i32) {
    %c0_i32 = arith.constant 0 : i32
    %c0_i32_0 = arith.constant 0 : i32
    %c0_i32_1 = arith.constant 0 : i32
    return %c0_i32, %c0_i32_0 : i32, i32
  }
  func.func @transform_10(%arg0: i32) -> (i32, i32) {
    %c0_i32 = arith.constant 0 : i32
    %c0_i32_0 = arith.constant 0 : i32
    %c0_i32_1 = arith.constant 0 : i32
    return %c0_i32, %c0_i32_0 : i32, i32
  }
  func.func @transform_11(%arg0: i32) -> (i32, i32) {
    %c0_i32 = arith.constant 0 : i32
    %c0_i32_0 = arith.constant 0 : i32
    return %arg0, %c0_i32 : i32, i32
  }
}

</mosaic_0001>

<llo_original>
// kernel: tpu_custom_call.1
$region0: #{tpu_custom_call.1}
  #allocation0 [shape = 'u32[]', space=smem, size = 0x4, offset = 0x4, fixed_abs, tag = 'smem constant byte address 0x4 - core index']
  #allocation1 [shape = 'u32[72,128]{1,0:T(1,128)}', space=vmem, size = 0x9000, scoped, tag = 'internal scratch']
  %s0 = inlined_call_operand.vmem [shape: f32[8,10], index: 0, kind: input, shape index: {}]
  %s1 = inlined_call_operand.vmem [shape: f32[8,10], index: 1, kind: input, shape index: {}]
  %s2 = inlined_call_operand.vmem [shape: f32[10,64], index: 2, kind: input, shape index: {}]
  %s3 = inlined_call_operand.vmem [shape: f32[10,64], index: 3, kind: input, shape index: {}]
  %s4 = inlined_call_operand.vmem [shape: f32[1,64], index: 4, kind: input, shape index: {}]
  %s5 = inlined_call_operand.vmem [shape: f32[64,32], index: 5, kind: input, shape index: {}]
  %s6 = inlined_call_operand.vmem [shape: f32[1,32], index: 6, kind: input, shape index: {}]
  %s7 = inlined_call_operand.vmem [shape: f32[32,32], index: 7, kind: input, shape index: {}]
  %s8 = inlined_call_operand.vmem [shape: f32[1,32], index: 8, kind: input, shape index: {}]
  %s9 = inlined_call_operand.vmem [shape: f32[32,2], index: 9, kind: input, shape index: {}]
  %s10 = inlined_call_operand.vmem [shape: f32[1,2], index: 10, kind: input, shape index: {}]
  %s11 = inlined_call_operand.vmem [shape: f32[8,2], index: 11, kind: output, shape index: {}]
  %s12 = sld [smem:[#allocation0]]
  $region54: #{tpu_custom_call.1} parent=0
    _
  %s14 = ssub.s32 1, %s12
  %s15 = scalar_select 0, %s14, %s12
  // Predicated region
  $region2: #{tpu_custom_call.1} parent=0 // pred_check
    _
  $region3: #{tpu_custom_call.1} parent=0 // pred_check_branch
    %17 = sbr.rel (0) target = $region5
  $region4: #{tpu_custom_call.1} parent=0 // pred_region
    _
  $region5: #{tpu_custom_call.1} parent=0 // pred_fallthru
    _
  // Predicated region
  $region6: #{tpu_custom_call.1} parent=0 // pred_check
    _
  $region7: #{tpu_custom_call.1} parent=0 // pred_check_branch
    %19 = sbr.rel (0) target = $region9
  $region8: #{tpu_custom_call.1} parent=0 // pred_region
    _
  $region9: #{tpu_custom_call.1} parent=0 // pred_fallthru
    _
  // Predicated region
  $region10: #{tpu_custom_call.1} parent=0 // pred_check
    _
  $region11: #{tpu_custom_call.1} parent=0 // pred_check_branch
    %21 = sbr.rel (0) target = $region13
  $region12: #{tpu_custom_call.1} parent=0 // pred_region
    _
  $region13: #{tpu_custom_call.1} parent=0 // pred_fallthru
    _
  // Predicated region
  $region14: #{tpu_custom_call.1} parent=0 // pred_check
    _
  $region15: #{tpu_custom_call.1} parent=0 // pred_check_branch
    %23 = sbr.rel (0) target = $region17
  $region16: #{tpu_custom_call.1} parent=0 // pred_region
    _
  $region17: #{tpu_custom_call.1} parent=0 // pred_fallthru
    _
  // Predicated region
  $region18: #{tpu_custom_call.1} parent=0 // pred_check
    _
  $region19: #{tpu_custom_call.1} parent=0 // pred_check_branch
    %25 = sbr.rel (0) target = $region21
  $region20: #{tpu_custom_call.1} parent=0 // pred_region
    _
  $region21: #{tpu_custom_call.1} parent=0 // pred_fallthru
    _
  // Predicated region
  $region22: #{tpu_custom_call.1} parent=0 // pred_check
    _
  $region23: #{tpu_custom_call.1} parent=0 // pred_check_branch
    %27 = sbr.rel (0) target = $region25
  $region24: #{tpu_custom_call.1} parent=0 // pred_region
    _
  $region25: #{tpu_custom_call.1} parent=0 // pred_fallthru
    _
  // Predicated region
  $region26: #{tpu_custom_call.1} parent=0 // pred_check
    _
  $region27: #{tpu_custom_call.1} parent=0 // pred_check_branch
    %29 = sbr.rel (0) target = $region29
  $region28: #{tpu_custom_call.1} parent=0 // pred_region
    _
  $region29: #{tpu_custom_call.1} parent=0 // pred_fallthru
    _
  // Predicated region
  $region30: #{tpu_custom_call.1} parent=0 // pred_check
    _
  $region31: #{tpu_custom_call.1} parent=0 // pred_check_branch
    %31 = sbr.rel (0) target = $region33
  $region32: #{tpu_custom_call.1} parent=0 // pred_region
    _
  $region33: #{tpu_custom_call.1} parent=0 // pred_fallthru
    _
  // Predicated region
  $region34: #{tpu_custom_call.1} parent=0 // pred_check
    _
  $region35: #{tpu_custom_call.1} parent=0 // pred_check_branch
    %33 = sbr.rel (0) target = $region37
  $region36: #{tpu_custom_call.1} parent=0 // pred_region
    _
  $region37: #{tpu_custom_call.1} parent=0 // pred_fallthru
    _
  // Predicated region
  $region38: #{tpu_custom_call.1} parent=0 // pred_check
    _
  $region39: #{tpu_custom_call.1} parent=0 // pred_check_branch
    %35 = sbr.rel (0) target = $region41
  $region40: #{tpu_custom_call.1} parent=0 // pred_region
    _
  $region41: #{tpu_custom_call.1} parent=0 // pred_fallthru
    _
  // Predicated region
  $region42: #{tpu_custom_call.1} parent=0 // pred_check
    _
  $region43: #{tpu_custom_call.1} parent=0 // pred_check_branch
    %37 = sbr.rel (0) target = $region45
  $region44: #{tpu_custom_call.1} parent=0 // pred_region
    _
  $region45: #{tpu_custom_call.1} parent=0 // pred_fallthru
    _
  %v38 = vld [vmem:[%s0] sm:$0xff]
  %v39 = vld [vmem:[%s2] sm:$0xff]
  %v40 = vld [vmem:[%s2 + $0x8] sm:$0x3]
  %v41 = vld [vmem:[%s1] sm:$0xff]
  %v42 = vld [vmem:[%s3] sm:$0xff]
  %v43 = vld [vmem:[%s3 + $0x8] sm:$0x3]
  %vm44 = vcmask 80896
  %v46 = vsel %vm44, %v41, 0
  %vm48 = vcmask 1041408
  %v50 = vsel %vm48, %v43, 0
  %52 = vmatpush.msra.mxu0 0.0
  %53 = vmatpush.msra.mxu0 0.0
  %54 = vmatpush.msra.mxu0 0.0
  %55 = vmatpush.msra.mxu0 0.0
  %56 = vmatpush.msra.mxu0 0.0
  %57 = vmatpush.msra.mxu0 0.0
  %58 = vmatpush.msra.mxu0 0.0
  %59 = vmatpush.msra.mxu0 0.0
  %60 = vmatpush.msra.mxu0 0.0
  %61 = vmatpush.msra.mxu0 0.0
  %62 = vmatpush.msra.mxu0 0.0
  %63 = vmatpush.msra.mxu0 0.0
  %64 = vmatpush.msra.mxu0 0.0
  %65 = vmatpush.msra.mxu0 0.0
  %66 = vmatpush.msra.mxu0 %v50
  %67 = vmatpush.msra.mxu0 %v42
  %68 = vmatmul.f32.gmra.mxu0 %v46
  %v69 = vpop.f32.mrf.mxu0
  %v70 = vadd.f32 0.0, %v69
  %71 = vdwg.mxu0
  %v73 = vsel %vm44, %v38, 0
  %v76 = vsel %vm48, %v40, 0
  %78 = vmatpush.msra.mxu0 0.0
  %79 = vmatpush.msra.mxu0 0.0
  %80 = vmatpush.msra.mxu0 0.0
  %81 = vmatpush.msra.mxu0 0.0
  %82 = vmatpush.msra.mxu0 0.0
  %83 = vmatpush.msra.mxu0 0.0
  %84 = vmatpush.msra.mxu0 0.0
  %85 = vmatpush.msra.mxu0 0.0
  %86 = vmatpush.msra.mxu0 0.0
  %87 = vmatpush.msra.mxu0 0.0
  %88 = vmatpush.msra.mxu0 0.0
  %89 = vmatpush.msra.mxu0 0.0
  %90 = vmatpush.msra.mxu0 0.0
  %91 = vmatpush.msra.mxu0 0.0
  %92 = vmatpush.msra.mxu0 %v76
  %93 = vmatpush.msra.mxu0 %v39
  %94 = vmatmul.f32.gmra.mxu0 %v73
  %v95 = vpop.f32.mrf.mxu0
  %v96 = vadd.f32 %v70, %v95
  %97 = vdwg.mxu0
  %v98 = vld [vmem:[%s4] sm:$0x1]
  %v100 = vperm.slane %v98, 0
  %v102 = vadd.f32 %v96, %v100
  %v103 = vmax.f32 %v102, 0.0
  %v104 = vld [vmem:[%s5] sm:$0xff]
  %v105 = vld [vmem:[%s5 + $0x8] sm:$0xff]
  %v106 = vld [vmem:[%s5 + $0x10] sm:$0xff]
  %v107 = vld [vmem:[%s5 + $0x18] sm:$0xff]
  %v108 = vld [vmem:[%s5 + $0x20] sm:$0xff]
  %v109 = vld [vmem:[%s5 + $0x28] sm:$0xff]
  %v110 = vld [vmem:[%s5 + $0x30] sm:$0xff]
  %v111 = vld [vmem:[%s5 + $0x38] sm:$0xff]
  %v112 = vld [vmem:[%s6] sm:$0x1]
  %v114 = vperm.slane %v112, 0
  %vm116 = vcmask 523264
  %v118 = vsel %vm116, %v103, 0
  %120 = vmatpush.msra.mxu0 0.0
  %121 = vmatpush.msra.mxu0 0.0
  %122 = vmatpush.msra.mxu0 0.0
  %123 = vmatpush.msra.mxu0 0.0
  %124 = vmatpush.msra.mxu0 0.0
  %125 = vmatpush.msra.mxu0 0.0
  %126 = vmatpush.msra.mxu0 0.0
  %127 = vmatpush.msra.mxu0 0.0
  %128 = vmatpush.msra.mxu0 %v111
  %129 = vmatpush.msra.mxu0 %v110
  %130 = vmatpush.msra.mxu0 %v109
  %131 = vmatpush.msra.mxu0 %v108
  %132 = vmatpush.msra.mxu0 %v107
  %133 = vmatpush.msra.mxu0 %v106
  %134 = vmatpush.msra.mxu0 %v105
  %135 = vmatpush.msra.mxu0 %v104
  %136 = vmatmul.f32.gmra.mxu0 %v118
  %v137 = vpop.f32.mrf.mxu0
  %v138 = vadd.f32 %v114, %v137
  %139 = vdwg.mxu0
  %v140 = vmax.f32 %v138, 0.0
  %v141 = vld [vmem:[%s7] sm:$0xff]
  %v142 = vld [vmem:[%s7 + $0x8] sm:$0xff]
  %v143 = vld [vmem:[%s7 + $0x10] sm:$0xff]
  %v144 = vld [vmem:[%s7 + $0x18] sm:$0xff]
  %v145 = vld [vmem:[%s8] sm:$0x1]
  %v147 = vperm.slane %v145, 0
  %vm149 = vcmask 261120
  %v151 = vsel %vm149, %v140, 0
  %153 = vmatpush.msra.mxu0 0.0
  %154 = vmatpush.msra.mxu0 0.0
  %155 = vmatpush.msra.mxu0 0.0
  %156 = vmatpush.msra.mxu0 0.0
  %157 = vmatpush.msra.mxu0 0.0
  %158 = vmatpush.msra.mxu0 0.0
  %159 = vmatpush.msra.mxu0 0.0
  %160 = vmatpush.msra.mxu0 0.0
  %161 = vmatpush.msra.mxu0 0.0
  %162 = vmatpush.msra.mxu0 0.0
  %163 = vmatpush.msra.mxu0 0.0
  %164 = vmatpush.msra.mxu0 0.0
  %165 = vmatpush.msra.mxu0 %v144
  %166 = vmatpush.msra.mxu0 %v143
  %167 = vmatpush.msra.mxu0 %v142
  %168 = vmatpush.msra.mxu0 %v141
  %169 = vmatmul.f32.gmra.mxu0 %v151
  %v170 = vpop.f32.mrf.mxu0
  %v171 = vadd.f32 %v147, %v170
  %172 = vdwg.mxu0
  %v173 = vmax.f32 %v171, 0.0
  %v174 = vld [vmem:[%s9] sm:$0xff]
  %v175 = vld [vmem:[%s9 + $0x8] sm:$0xff]
  %v176 = vld [vmem:[%s9 + $0x10] sm:$0xff]
  %v177 = vld [vmem:[%s9 + $0x18] sm:$0xff]
  %v178 = vld [vmem:[%s10] sm:$0x1]
  %v180 = vperm.slane %v178, 0
  %v183 = vsel %vm149, %v173, 0
  %185 = vmatpush.msra.mxu0 0.0
  %186 = vmatpush.msra.mxu0 0.0
  %187 = vmatpush.msra.mxu0 0.0
  %188 = vmatpush.msra.mxu0 0.0
  %189 = vmatpush.msra.mxu0 0.0
  %190 = vmatpush.msra.mxu0 0.0
  %191 = vmatpush.msra.mxu0 0.0
  %192 = vmatpush.msra.mxu0 0.0
  %193 = vmatpush.msra.mxu0 0.0
  %194 = vmatpush.msra.mxu0 0.0
  %195 = vmatpush.msra.mxu0 0.0
  %196 = vmatpush.msra.mxu0 0.0
  %197 = vmatpush.msra.mxu0 %v177
  %198 = vmatpush.msra.mxu0 %v176
  %199 = vmatpush.msra.mxu0 %v175
  %200 = vmatpush.msra.mxu0 %v174
  %201 = vmatmul.f32.gmra.mxu0 %v183
  %v202 = vpop.f32.mrf.mxu0
  %v203 = vadd.f32 %v180, %v202
  %204 = vdwg.mxu0
  %v205 = vand.u32 2147483647, %v203
  %v206 = vsub.f32 0.0, %v205
  %v207 = vmul.f32 %v206, 1.442695
  %v208 = vpow.pop %v207
  %v209 = vadd.f32 %v208, 1.0
  %v210 = vrcp.pop %v209
  %v211 = vmul.f32 %v209, %v210
  %v212 = vsub.f32 1.0, %v211
  %v213 = vmul.f32 %v210, %v212
  %v214 = vadd.f32 %v210, %v213
  %vm215 = vweird.f32 %v209
  %vm216 = vweird.f32 %v210
  %vm217 = vmor %vm215, %vm216
  %v218 = vsel %vm217, %v210, %v214
  %v219 = vand.u32 2147483647, %v209
  %vm220 = vcmp.eq.f32.partialorder %v219, 8.507059e+37
  %v221 = vand.u32 %v209, 2147483648
  %v222 = vor.u32 1.1754944e-38, %v221
  %v223 = vsel %vm220, %v222, %v218
  %vm224 = vcmp.ge.f32.partialorder %v203, 0.0
  %v225 = vmul.f32 %v208, %v223
  %v226 = vsel %vm224, %v223, %v225
  %v227 = vmax.f32 %v203, -13.815511
  %v228 = vmin.f32 %v227, 0.0
  %v229 = vlaneseq
  %v230 = vand.u32 %v229, 127
  %vm231 = vcmp.eq.s32.totalorder %v230, 0
  %v232 = vsel %vm231, %v226, %v228
  %vm233 = vcmask 15360
  %234 = vst.msk [vmem:[%s11] sm:$0xff] %vm233, %v232
  // Predicated region
  $region46: #{tpu_custom_call.1} parent=0 // pred_check
    _
  $region47: #{tpu_custom_call.1} parent=0 // pred_check_branch
    %236 = sbr.rel (0) target = $region49
  $region48: #{tpu_custom_call.1} parent=0 // pred_region
    _
  $region49: #{tpu_custom_call.1} parent=0 // pred_fallthru
    _
  // Predicated region
  $region50: #{tpu_custom_call.1} parent=0 // pred_check
    _
  $region51: #{tpu_custom_call.1} parent=0 // pred_check_branch
    %238 = sbr.rel (0) target = $region53
  $region52: #{tpu_custom_call.1} parent=0 // pred_region
    _
  $region53: #{tpu_custom_call.1} parent=0 // pred_fallthru
    _

</llo_original>
